<compile_context>
chip_gen: v5e
topology: v5e:2x2
jax: 0.10.0
libtpu: 0.0.40
codegen_flags: <defaults>
</compile_context>

<pallas_src>
import jax
import jax.numpy as jnp
import numpy as np
from jax.experimental import pallas as pl
from jax.experimental.pallas import tpu as pltpu


def make_attention_kernel(N, C, num_heads, compute_dtype, has_qkv_bias):
    hd = C // num_heads

    def kernel(*refs):
        if has_qkv_bias:
            x_ref, wqkv_ref, bqkv_ref, wproj_ref, bproj_ref, o_ref = refs
        else:
            x_ref, wqkv_ref, wproj_ref, bproj_ref, o_ref = refs
            bqkv_ref = None

        x = x_ref[0]                                              # (N, C) bf16

        # Head-batched, full-depth (K=C) QKV projection. The weight is laid
        # out (H, C, 3*hd) in the wrapper, so the output already has per-head
        # [q | k | v] lanes -> no per-head relayout afterwards. `scale` was
        # pre-folded into the Q columns (and Q bias) in the wrapper.
        xh = jnp.broadcast_to(x, (num_heads, N, C))               # (H, N, C)
        qkv = jnp.einsum("hnc,hcd->hnd", xh, wqkv_ref[...],
                         preferred_element_type=jnp.float32)      # (H, N, 3*hd) f32
        if has_qkv_bias:
            qkv = qkv + bqkv_ref[...]                             # (H, 1, 3*hd) broadcast
        qkv = qkv.astype(compute_dtype)                           # single bf16 cast

        q = qkv[:, :, :hd]                                        # (H, N, hd)
        k = qkv[:, :, hd:2 * hd]                                  # (H, N, hd)
        v = qkv[:, :, 2 * hd:]                                    # (H, N, hd)

        # Head-batched scores, f32 accumulation on the MXU.
        s = jnp.einsum("hnd,hmd->hnm", q, k,
                       preferred_element_type=jnp.float32)        # (H, N, N)

        # Numerically-stable softmax with deferred normalization.
        s = s - jnp.max(s, axis=-1, keepdims=True)
        p = jnp.exp(s)
        denom = jnp.sum(p, axis=-1, keepdims=True)                # (H, N, 1)
        # TODO(synk): attn_drop is identity here (p=0.0 / inference); RNG dropout not modeled.

        o = jnp.einsum("hnm,hmd->hnd", p.astype(compute_dtype), v,
                       preferred_element_type=jnp.float32)        # (H, N, hd)
        o = o * pl.reciprocal(denom, approx=True)                 # deferred 1/rowsum

        # Head-batched projection then one reduction over heads:
        #   y = sum_h o_h @ Wproj[h*hd:(h+1)*hd, :]
        yh = jnp.einsum("hnd,hdc->hnc", o.astype(compute_dtype), wproj_ref[...],
                        preferred_element_type=jnp.float32)       # (H, N, C)
        y = jnp.sum(yh, axis=0) + bproj_ref[...]                  # (N, C)

        # TODO(synk): proj_drop is identity here (p=0.0 / inference).
        # TODO(synk): output kept f32 for parity with the PyTorch module; emit
        # bf16 here if the downstream consumer accepts it (halves writeback,
        # lane-dense stores).
        o_ref[0] = y.astype(o_ref.dtype)

    return kernel


def attention_forward(x, wqkv, wproj, bproj, *, num_heads, bqkv=None,
                      compute_dtype=jnp.bfloat16):
    """x: (B, N, C) f32.  wqkv: (C, 3C), wproj: (C, C) in 'x @ W' layout.

    bqkv=None corresponds to qkv_bias=False (the module default); the bias add
    and its DMA are then skipped entirely inside the kernel.
    """
    B, N, C = x.shape
    assert C % num_heads == 0
    hd = C // num_heads
    scale = float(hd) ** -0.5
    has_qkv_bias = bqkv is not None

    # Per-head [q|k|v] weight layout (H, C, 3*hd), with `scale` folded into the
    # Q columns so the kernel never multiplies by it.  Cast to bf16 here (also
    # halves HBM->VMEM weight bytes); accumulation stays f32 in the kernel.
    w3 = wqkv.reshape(C, 3, num_heads, hd)                 # [c, part, h, d]
    w3 = jnp.transpose(w3, (2, 0, 1, 3))                   # [h, c, part, d]
    w3 = w3.reshape(num_heads, C, 3 * hd)                  # per head: [q | k | v]
    scale_row = jnp.concatenate(
        [jnp.full((hd,), scale, jnp.float32), jnp.ones((2 * hd,), jnp.float32)])
    wqkv_h = (w3 * scale_row).astype(compute_dtype)        # (H, C, 3*hd)

    wproj_h = wproj.reshape(num_heads, hd, C).astype(compute_dtype)  # (H, hd, C)
    bproj_f = bproj.reshape(1, C).astype(jnp.float32)
    x_c = x.astype(compute_dtype)

    kernel = make_attention_kernel(N, C, num_heads, compute_dtype, has_qkv_bias)

    in_specs = [
        pl.BlockSpec((1, N, C), lambda b: (b, 0, 0)),                 # per-batch activations
        pl.BlockSpec((num_heads, C, 3 * hd), lambda b: (0, 0, 0)),    # QKV weight (resident)
    ]
    inputs = [x_c, wqkv_h]
    if has_qkv_bias:
        b3 = bqkv.reshape(3, num_heads, hd)                # [part, h, d]
        b3 = jnp.transpose(b3, (1, 0, 2)).reshape(num_heads, 1, 3 * hd)
        bqkv_h = (b3 * scale_row).astype(jnp.float32)      # scale folded into Q bias too
        in_specs.append(pl.BlockSpec((num_heads, 1, 3 * hd), lambda b: (0, 0, 0)))
        inputs.append(bqkv_h)
    in_specs += [
        pl.BlockSpec((num_heads, hd, C), lambda b: (0, 0, 0)),        # proj weight (head-major)
        pl.BlockSpec((1, C), lambda b: (0, 0)),                       # proj bias
    ]
    inputs += [wproj_h, bproj_f]

    return pl.pallas_call(
        kernel,
        out_shape=jax.ShapeDtypeStruct((B, N, C), jnp.float32),
        grid_spec=pltpu.PrefetchScalarGridSpec(
            num_scalar_prefetch=0,
            grid=(B,),                      # B>=2 keeps both v7x TensorCores busy
            in_specs=in_specs,
            out_specs=pl.BlockSpec((1, N, C), lambda b: (b, 0, 0)),
        ),
        compiler_params=pltpu.CompilerParams(
            dimension_semantics=("parallel",)),   # batch -> megacore / both v7x TCs
    )(*inputs)


def attention_reference(x, wqkv, bqkv, wproj, bproj, num_heads):
    """Pure-JAX f32 reference matching the PyTorch module."""
    B, N, C = x.shape
    hd = C // num_heads
    scale = float(hd) ** -0.5
    qkv = x @ wqkv + bqkv                                          # (B, N, 3C)
    qkv = qkv.reshape(B, N, 3, num_heads, hd).transpose(2, 0, 3, 1, 4)
    q, k, v = qkv[0], qkv[1], qkv[2]                               # (B, H, N, hd)
    attn = (q @ jnp.swapaxes(k, -1, -2)) * scale
    attn = jax.nn.softmax(attn, axis=-1)
    out = jnp.swapaxes(attn @ v, 1, 2).reshape(B, N, C)
    return out @ wproj + bproj


if __name__ == "__main__":
    key = jax.random.PRNGKey(0)
    B, N, C, H = 2, 16, 64, 8          # batch, seq, dim, heads (head_dim = 8)

    kx, kw1, kw2, kb2 = jax.random.split(key, 4)
    x = jax.random.normal(kx, (B, N, C), jnp.float32)
    lim = 1.0 / (C ** 0.5)                                         # PyTorch Linear default init
    wqkv = jax.random.uniform(kw1, (C, 3 * C), jnp.float32, -lim, lim)
    wproj = jax.random.uniform(kw2, (C, C), jnp.float32, -lim, lim)
    bproj = jax.random.uniform(kb2, (C,), jnp.float32, -lim, lim)

    # qkv_bias=False (module default) -> bqkv is omitted and statically skipped.
    out = attention_forward(x, wqkv, wproj, bproj, num_heads=H)
    out = jax.block_until_ready(out)

    ref = attention_reference(x, wqkv, jnp.zeros((3 * C,), jnp.float32),
                              wproj, bproj, H)
    np.testing.assert_allclose(np.asarray(out), np.asarray(ref),
                               rtol=2e-2, atol=2e-2)
    print("KERNEL_OK")
</pallas_src>

<mosaic_0001>
module attributes {stable_mosaic.version = 11 : i64} {
  func.func @kernel(%arg0: i32, %arg1: memref<1x16x64xbf16, #tpu.memory_space<vmem>>, %arg2: memref<8x64x24xbf16, #tpu.memory_space<vmem>>, %arg3: memref<8x8x64xbf16, #tpu.memory_space<vmem>>, %arg4: memref<1x64xf32, #tpu.memory_space<vmem>>, %arg5: memref<1x16x64xf32, #tpu.memory_space<vmem>>) attributes {dimension_semantics = [#tpu.dimension_semantics<parallel>], iteration_bounds = array<i64: 2>, scalar_prefetch = 0 : i64, scratch_operands = 0 : i64, tpu.core_type = #tpu.core_type<tc>, window_params = [{transform_indices = @transform_0, window_bounds = array<i64: 1, 16, 64>}, {pipeline_mode = #tpu.pipeline_mode<synchronous>, transform_indices = @transform_1, window_bounds = array<i64: 8, 64, 24>}, {pipeline_mode = #tpu.pipeline_mode<synchronous>, transform_indices = @transform_2, window_bounds = array<i64: 8, 8, 64>}, {pipeline_mode = #tpu.pipeline_mode<synchronous>, transform_indices = @transform_3, window_bounds = array<i64: 1, 64>}, {transform_indices = @transform_4, window_bounds = array<i64: 1, 16, 64>}]} {
    %c0 = arith.constant 0 : index
    %c0_0 = arith.constant 0 : index
    %c0_1 = arith.constant 0 : index
    %0 = vector.load %arg1[%c0, %c0_0, %c0_1] : memref<1x16x64xbf16, #tpu.memory_space<vmem>>, vector<1x16x64xbf16>
    %1 = vector.shape_cast %0 : vector<1x16x64xbf16> to vector<16x64xbf16>
    %2 = vector.shape_cast %1 : vector<16x64xbf16> to vector<1x16x64xbf16>
    %3 = vector.broadcast %2 : vector<1x16x64xbf16> to vector<8x16x64xbf16>
    %c0_2 = arith.constant 0 : index
    %c0_3 = arith.constant 0 : index
    %c0_4 = arith.constant 0 : index
    %4 = vector.load %arg2[%c0_2, %c0_3, %c0_4] : memref<8x64x24xbf16, #tpu.memory_space<vmem>>, vector<8x64x24xbf16>
    "tpu.trace_start"() <{level = 10 : i32, message = "hnc,hcd->hnd"}> : () -> ()
    %cst = arith.constant dense<0.000000e+00> : vector<8x16x24xf32>
    %5 = tpu.matmul %3, %4, %cst {dimension_numbers = #tpu.dot_dimension_numbers<[2], [1], [1], [2], [0, 0, 0, 1, 1, 2], [0], [0]>} : vector<8x16x64xbf16>, vector<8x64x24xbf16>, vector<8x16x24xf32> -> vector<8x16x24xf32>
    "tpu.trace_stop"() : () -> ()
    %6 = arith.truncf %5 : vector<8x16x24xf32> to vector<8x16x24xbf16>
    %7 = vector.extract_strided_slice %6 {offsets = [0, 0, 0], sizes = [8, 16, 8], strides = [1, 1, 1]} : vector<8x16x24xbf16> to vector<8x16x8xbf16>
    %8 = vector.extract_strided_slice %6 {offsets = [0, 0, 8], sizes = [8, 16, 8], strides = [1, 1, 1]} : vector<8x16x24xbf16> to vector<8x16x8xbf16>
    %9 = vector.extract_strided_slice %6 {offsets = [0, 0, 16], sizes = [8, 16, 8], strides = [1, 1, 1]} : vector<8x16x24xbf16> to vector<8x16x8xbf16>
    "tpu.trace_start"() <{level = 10 : i32, message = "hnd,hmd->hnm"}> : () -> ()
    %cst_5 = arith.constant dense<0.000000e+00> : vector<8x16x16xf32>
    %10 = tpu.matmul %7, %8, %cst_5 {dimension_numbers = #tpu.dot_dimension_numbers<[2], [2], [1], [1], [0, 0, 0, 1, 1, 1], [0], [0]>} : vector<8x16x8xbf16>, vector<8x16x8xbf16>, vector<8x16x16xf32> -> vector<8x16x16xf32>
    "tpu.trace_stop"() : () -> ()
    %cst_6 = arith.constant dense<0xFF800000> : vector<8x16xf32>
    %11 = vector.multi_reduction <maximumf>, %10, %cst_6 [2] : vector<8x16x16xf32> to vector<8x16xf32>
    %12 = vector.shape_cast %11 : vector<8x16xf32> to vector<8x16x1xf32>
    %13 = vector.broadcast %12 : vector<8x16x1xf32> to vector<8x16x16xf32>
    %14 = arith.subf %10, %13 : vector<8x16x16xf32>
    %15 = math.exp %14 : vector<8x16x16xf32>
    %cst_7 = arith.constant dense<0.000000e+00> : vector<8x16xf32>
    %16 = vector.multi_reduction <add>, %15, %cst_7 [2] : vector<8x16x16xf32> to vector<8x16xf32>
    %17 = vector.shape_cast %16 : vector<8x16xf32> to vector<8x16x1xf32>
    %18 = arith.truncf %15 : vector<8x16x16xf32> to vector<8x16x16xbf16>
    "tpu.trace_start"() <{level = 10 : i32, message = "hnm,hmd->hnd"}> : () -> ()
    %cst_8 = arith.constant dense<0.000000e+00> : vector<8x16x8xf32>
    %19 = tpu.matmul %18, %9, %cst_8 {dimension_numbers = #tpu.dot_dimension_numbers<[2], [1], [1], [2], [0, 0, 0, 1, 1, 2], [0], [0]>} : vector<8x16x16xbf16>, vector<8x16x8xbf16>, vector<8x16x8xf32> -> vector<8x16x8xf32>
    "tpu.trace_stop"() : () -> ()
    %20 = tpu.reciprocal %17 {approx = true} : vector<8x16x1xf32> -> vector<8x16x1xf32>
    %21 = vector.broadcast %20 : vector<8x16x1xf32> to vector<8x16x8xf32>
    %22 = arith.mulf %19, %21 : vector<8x16x8xf32>
    %23 = arith.truncf %22 : vector<8x16x8xf32> to vector<8x16x8xbf16>
    %c0_9 = arith.constant 0 : index
    %c0_10 = arith.constant 0 : index
    %c0_11 = arith.constant 0 : index
    %24 = vector.load %arg3[%c0_9, %c0_10, %c0_11] : memref<8x8x64xbf16, #tpu.memory_space<vmem>>, vector<8x8x64xbf16>
    "tpu.trace_start"() <{level = 10 : i32, message = "hnd,hdc->hnc"}> : () -> ()
    %cst_12 = arith.constant dense<0.000000e+00> : vector<8x16x64xf32>
    %25 = tpu.matmul %23, %24, %cst_12 {dimension_numbers = #tpu.dot_dimension_numbers<[2], [1], [1], [2], [0, 0, 0, 1, 1, 2], [0], [0]>} : vector<8x16x8xbf16>, vector<8x8x64xbf16>, vector<8x16x64xf32> -> vector<8x16x64xf32>
    "tpu.trace_stop"() : () -> ()
    %cst_13 = arith.constant dense<0.000000e+00> : vector<16x64xf32>
    %26 = vector.multi_reduction <add>, %25, %cst_13 [0] : vector<8x16x64xf32> to vector<16x64xf32>
    %c0_14 = arith.constant 0 : index
    %c0_15 = arith.constant 0 : index
    %27 = vector.load %arg4[%c0_14, %c0_15] : memref<1x64xf32, #tpu.memory_space<vmem>>, vector<1x64xf32>
    %28 = vector.broadcast %27 : vector<1x64xf32> to vector<16x64xf32>
    %29 = arith.addf %26, %28 : vector<16x64xf32>
    %c0_16 = arith.constant 0 : index
    %c0_17 = arith.constant 0 : index
    %c0_18 = arith.constant 0 : index
    %30 = vector.load %arg5[%c0_16, %c0_17, %c0_18] : memref<1x16x64xf32, #tpu.memory_space<vmem>>, vector<1x16x64xf32>
    %31 = vector.shape_cast %30 : vector<1x16x64xf32> to vector<16x64xf32>
    %32 = vector.shape_cast %29 : vector<16x64xf32> to vector<1x16x64xf32>
    tpu.vector_store %arg5[%c0_16, %c0_17, %c0_18], %32 {strides = array<i32>} : memref<1x16x64xf32, #tpu.memory_space<vmem>>, vector<1x16x64xf32>,
    return
  }
  func.func @transform_0(%arg0: i32) -> (i32, i32, i32) {
    %c0_i32 = arith.constant 0 : i32
    %c0_i32_0 = arith.constant 0 : i32
    %c0_i32_1 = arith.constant 0 : i32
    return %arg0, %c0_i32, %c0_i32_0 : i32, i32, i32
  }
  func.func @transform_1(%arg0: i32) -> (i32, i32, i32) {
    %c0_i32 = arith.constant 0 : i32
    %c0_i32_0 = arith.constant 0 : i32
    %c0_i32_1 = arith.constant 0 : i32
    %c0_i32_2 = arith.constant 0 : i32
    return %c0_i32, %c0_i32_0, %c0_i32_1 : i32, i32, i32
  }
  func.func @transform_2(%arg0: i32) -> (i32, i32, i32) {
    %c0_i32 = arith.constant 0 : i32
    %c0_i32_0 = arith.constant 0 : i32
    %c0_i32_1 = arith.constant 0 : i32
    %c0_i32_2 = arith.constant 0 : i32
    return %c0_i32, %c0_i32_0, %c0_i32_1 : i32, i32, i32
  }
  func.func @transform_3(%arg0: i32) -> (i32, i32) {
    %c0_i32 = arith.constant 0 : i32
    %c0_i32_0 = arith.constant 0 : i32
    %c0_i32_1 = arith.constant 0 : i32
    return %c0_i32, %c0_i32_0 : i32, i32
  }
  func.func @transform_4(%arg0: i32) -> (i32, i32, i32) {
    %c0_i32 = arith.constant 0 : i32
    %c0_i32_0 = arith.constant 0 : i32
    %c0_i32_1 = arith.constant 0 : i32
    return %arg0, %c0_i32, %c0_i32_0 : i32, i32, i32
  }
}

</mosaic_0001>

<llo_original>
// kernel: tpu_custom_call.1
$region0: #{tpu_custom_call.1}
  #allocation0 [shape = 'u32[]', space=smem, size = 0x4, offset = 0x4, fixed_abs, tag = 'smem constant byte address 0x4 - core index']
  #allocation1 [shape = 'u32[72,128]{1,0:T(1,128)}', space=vmem, size = 0x9000, scoped, tag = 'internal scratch']
  %s0 = inlined_call_operand.vmem [shape: bf16[2,16,64], index: 0, kind: input, shape index: {}]
  %s1 = inlined_call_operand.vmem [shape: bf16[8,64,24], index: 1, kind: input, shape index: {}]
  %s2 = inlined_call_operand.vmem [shape: bf16[8,8,64], index: 2, kind: input, shape index: {}]
  %s3 = inlined_call_operand.vmem [shape: f32[1,64], index: 3, kind: input, shape index: {}]
  %s4 = inlined_call_operand.hbm [shape: f32[2,16,64], index: 4, kind: output, shape index: {}]
  %s5 = sld [smem:[#allocation0]]
  $region49: #{tpu_custom_call.1} parent=0
    _
  %s7 = ssub.s32 1, %s5
  %s8 = scalar_select 0, %s7, %s5
  $region1: #{tpu_custom_call.1} parent=0
    #allocation2 [shape = 'u8[16384]{0}', space=vmem, size = 0x4000, scoped, tag = 'output window, operand 0']
    #allocation3 [shape = 's32[2]{0}', space=sflag, size = 0x8, scoped, tag = 'scoped memory for tpu_custom_call.1']
    %9 = vsyncpa [#allocation3], 0
    %s10 = scalar_lea.sflag [#allocation3], 1
    %11 = vsyncpa %s10, 0
    loop: start=0, step=1, limit=4
    $region2: #{tpu_custom_call.1} parent=1 // loop_pre_header
      _
    $region3: #{tpu_custom_call.1} parent=1 // loop_header
      %s13 = sphi 0, %s17
      %p14 = scmp.ge.s32.totalorder %s13, 4
      %s23 = sphi 0, %s25
      %s26 = sphi 0, %s23
      %s27 = sphi 0, %s26
      %s43 = sphi 0, %s27
      %s47 = sphi 0, %s47
      %s49 = sphi 0, %s47
      %s50 = sphi 0, %s49
      %s64 = sphi 0, %s50
      %s68 = sphi 0, %s68
      %s70 = sphi 0, %s68
      %s71 = sphi 0, %s70
      %s85 = sphi 0, %s71
      %s89 = sphi 0, %s89
      %s91 = sphi 0, %s89
      %s92 = sphi 0, %s91
      %s106 = sphi 0, %s92
      %s112 = sphi 0, %s114
      %s115 = sphi 0, %s112
      %s116 = sphi 0, %s115
      %s132 = sphi 0, %s116
    $region4: #{tpu_custom_call.1} parent=1 // loop_header_branch
      %16 = sbr.rel (%p14) target = $region8
    $region5: #{tpu_custom_call.1} parent=1 // loop_body
      %s18 = ssub.s32 %s13, 1
      %s19 = ssub.s32 %s13, 2
      %s20 = sadd.s32 %s13, 1
      %s21 = ssub.s32 %s13, %s20
      %p22 = scmp.eq.s32.totalorder %s21, 0
      %s24 = sadd.s32 %s23, 1
      %s25 = scalar_select %p22, %s23, %s24
      %p28 = pneg %p22
      %p29 = scmp.eq.s32.totalorder %s13, 1
      %p30 = por %p28, %p29
      %p31 = scmp.ne.s32.totalorder %s23, %s26
      %p32 = scmp.eq.s32.totalorder %s13, 0
      %p33 = por %p31, %p32
      %p34 = scmp.ne.s32.totalorder %s23, %s26
      %p35 = scmp.eq.s32.totalorder %s18, 1
      %p36 = por %p34, %p35
      %p37 = scmp.ne.s32.totalorder %s26, %s27
      %p38 = scmp.eq.s32.totalorder %s18, 0
      %p39 = por %p37, %p38
      %p40 = scmp.ne.s32.totalorder %s26, %s27
      %p41 = scmp.eq.s32.totalorder %s19, 1
      %p42 = por %p40, %p41
      %p44 = scmp.ne.s32.totalorder %s27, %s43
      %p45 = scmp.eq.s32.totalorder %s19, 0
      %p46 = por %p44, %p45
      %s48 = sadd.s32 %s47, 1
      %p51 = scmp.eq.s32.totalorder %s13, 1
      %p52 = scmp.ne.s32.totalorder %s47, %s49
      %p53 = scmp.eq.s32.totalorder %s13, 0
      %p54 = por %p52, %p53
      %p55 = scmp.ne.s32.totalorder %s47, %s49
      %p56 = scmp.eq.s32.totalorder %s18, 1
      %p57 = por %p55, %p56
      %p58 = scmp.ne.s32.totalorder %s49, %s50
      %p59 = scmp.eq.s32.totalorder %s18, 0
      %p60 = por %p58, %p59
      %p61 = scmp.ne.s32.totalorder %s49, %s50
      %p62 = scmp.eq.s32.totalorder %s19, 1
      %p63 = por %p61, %p62
      %p65 = scmp.ne.s32.totalorder %s50, %s64
      %p66 = scmp.eq.s32.totalorder %s19, 0
      %p67 = por %p65, %p66
      %s69 = sadd.s32 %s68, 1
      %p72 = scmp.eq.s32.totalorder %s13, 1
      %p73 = scmp.ne.s32.totalorder %s68, %s70
      %p74 = scmp.eq.s32.totalorder %s13, 0
      %p75 = por %p73, %p74
      %p76 = scmp.ne.s32.totalorder %s68, %s70
      %p77 = scmp.eq.s32.totalorder %s18, 1
      %p78 = por %p76, %p77
      %p79 = scmp.ne.s32.totalorder %s70, %s71
      %p80 = scmp.eq.s32.totalorder %s18, 0
      %p81 = por %p79, %p80
      %p82 = scmp.ne.s32.totalorder %s70, %s71
      %p83 = scmp.eq.s32.totalorder %s19, 1
      %p84 = por %p82, %p83
      %p86 = scmp.ne.s32.totalorder %s71, %s85
      %p87 = scmp.eq.s32.totalorder %s19, 0
      %p88 = por %p86, %p87
      %s90 = sadd.s32 %s89, 1
      %p93 = scmp.eq.s32.totalorder %s13, 1
      %p94 = scmp.ne.s32.totalorder %s89, %s91
      %p95 = scmp.eq.s32.totalorder %s13, 0
      %p96 = por %p94, %p95
      %p97 = scmp.ne.s32.totalorder %s89, %s91
      %p98 = scmp.eq.s32.totalorder %s18, 1
      %p99 = por %p97, %p98
      %p100 = scmp.ne.s32.totalorder %s91, %s92
      %p101 = scmp.eq.s32.totalorder %s18, 0
      %p102 = por %p100, %p101
      %p103 = scmp.ne.s32.totalorder %s91, %s92
      %p104 = scmp.eq.s32.totalorder %s19, 1
      %p105 = por %p103, %p104
      %p107 = scmp.ne.s32.totalorder %s92, %s106
      %p108 = scmp.eq.s32.totalorder %s19, 0
      %p109 = por %p107, %p108
      %s110 = ssub.s32 %s13, %s20
      %p111 = scmp.eq.s32.totalorder %s110, 0
      %s113 = sadd.s32 %s112, 1
      %s114 = scalar_select %p111, %s112, %s113
      %p117 = pneg %p111
      %p118 = scmp.eq.s32.totalorder %s13, 1
      %p119 = por %p117, %p118
      %p120 = scmp.ne.s32.totalorder %s112, %s115
      %p121 = scmp.eq.s32.totalorder %s13, 0
      %p122 = por %p120, %p121
      %p123 = scmp.ne.s32.totalorder %s112, %s115
      %p124 = scmp.eq.s32.totalorder %s18, 1
      %p125 = por %p123, %p124
      %p126 = scmp.ne.s32.totalorder %s115, %s116
      %p127 = scmp.eq.s32.totalorder %s18, 0
      %p128 = por %p126, %p127
      %p129 = scmp.ne.s32.totalorder %s115, %s116
      %p130 = scmp.eq.s32.totalorder %s19, 1
      %p131 = por %p129, %p130
      %p133 = scmp.ne.s32.totalorder %s116, %s132
      %p134 = scmp.eq.s32.totalorder %s19, 0
      %p135 = por %p133, %p134
      %p136 = scmp.le.s32.totalorder 1, %s13
      %p137 = scmp.lt.s32.totalorder %s13, 3
      %p138 = pnand %p136, %p137
      %p139 = pneg %p138
      // Predicated region
      $region9: #{tpu_custom_call.1} parent=5 // pred_check
        _
      $region10: #{tpu_custom_call.1} parent=5 // pred_check_branch
        %141 = sbr.rel (%p138) target = $region12
      $region11: #{tpu_custom_call.1} parent=5 // pred_region
        %s142 = ssub.s32 %s13, 1
        // Predicated region
        $region13: #{tpu_custom_call.1} parent=11 // pred_check
          %p143 = pneg %p60
        $region14: #{tpu_custom_call.1} parent=11 // pred_check_branch
          %145 = sbr.rel (%p143) target = $region16
        $region15: #{tpu_custom_call.1} parent=11 // pred_region
          _
        $region16: #{tpu_custom_call.1} parent=11 // pred_fallthru
          _
        // Predicated region
        $region17: #{tpu_custom_call.1} parent=11 // pred_check
          %p146 = pneg %p81
        $region18: #{tpu_custom_call.1} parent=11 // pred_check_branch
          %148 = sbr.rel (%p146) target = $region20
        $region19: #{tpu_custom_call.1} parent=11 // pred_region
          _
        $region20: #{tpu_custom_call.1} parent=11 // pred_fallthru
          _
        // Predicated region
        $region21: #{tpu_custom_call.1} parent=11 // pred_check
          %p149 = pneg %p102
        $region22: #{tpu_custom_call.1} parent=11 // pred_check_branch
          %151 = sbr.rel (%p149) target = $region24
        $region23: #{tpu_custom_call.1} parent=11 // pred_region
          _
        $region24: #{tpu_custom_call.1} parent=11 // pred_fallthru
          _
      $region12: #{tpu_custom_call.1} parent=5 // pred_fallthru
        _
      %p152 = scmp.lt.s32.totalorder %s13, 2
      // Predicated region
      $region25: #{tpu_custom_call.1} parent=5 // pred_check
        %p153 = pneg %p152
      $region26: #{tpu_custom_call.1} parent=5 // pred_check_branch
        %155 = sbr.rel (%p153) target = $region28
      $region27: #{tpu_custom_call.1} parent=5 // pred_region
        // Predicated region
        $region29: #{tpu_custom_call.1} parent=27 // pred_check
          %p156 = pneg %p33
        $region30: #{tpu_custom_call.1} parent=27 // pred_check_branch
          %158 = sbr.rel (%p156) target = $region32
        $region31: #{tpu_custom_call.1} parent=27 // pred_region
          %p159 = scmp.lt.s32.totalorder %s13, 1
          %s160 = scalar_select %p159, %s13, 1
          %s161 = smul.addr %s160, 2
          %s162 = smul.addr %s161, 4
          %s163 = scalar_lea.vmem %s0, %s162
        $region32: #{tpu_custom_call.1} parent=27 // pred_fallthru
          _
      $region28: #{tpu_custom_call.1} parent=5 // pred_fallthru
        _
      %p164 = scmp.le.s32.totalorder 1, %s13
      %p165 = scmp.lt.s32.totalorder %s13, 3
      %p166 = pnand %p164, %p165
      %p167 = pneg %p166
      // Predicated region
      $region33: #{tpu_custom_call.1} parent=5 // pred_check
        _
      $region34: #{tpu_custom_call.1} parent=5 // pred_check_branch
        %169 = sbr.rel (%p166) target = $region36
      $region35: #{tpu_custom_call.1} parent=5 // pred_region
        %s170 = ssub.s32 %s13, 1
        %p171 = scmp.lt.s32.totalorder %s18, 1
        %s172 = scalar_select %p171, %s18, 1
        %s173 = smul.addr %s172, 2
        %s174 = smul.addr %s173, 4
        %s175 = scalar_lea.vmem %s0, %s174
        %p176 = pneg %p39
        %p177 = pneg %p36
        %p178 = pneg %p60
        %p179 = pneg %p57
        %p180 = pneg %p81
        %p181 = pneg %p78
        %p182 = pneg %p102
        %p183 = pneg %p99
        %p184 = pneg %p128
        %p185 = pneg %p125
        %s186 = sand.u32 %s115, 1
        %s187 = scalar_lea.sflag [#allocation3], %s186
        %s188 = sand.u32 %s115, 1
        %s189 = smul.addr %s188, 16
        %s190 = scalar_lea.vmem [#allocation2], %s189
        %p191 = scmp.lt.s32.totalorder %s18, 1
        %s192 = scalar_select %p191, %s18, 1
        %s193 = smul.addr %s192, 2
        %s194 = smul.addr %s193, 4
        %s195 = scalar_lea.vmem %s0, %s194
        %v197 = vld [vmem:[%s195] sm:$0xf]
        %v198 = vld [vmem:[%s195 + $0x4] sm:$0xf]
        %v199 = vld [vmem:[%s1] sm:$0xf]
        %v200 = vld [vmem:[%s1 + $0x4] sm:$0xf]
        %v201 = vld [vmem:[%s1 + $0x8] sm:$0xf]
        %v202 = vld [vmem:[%s1 + $0xc] sm:$0xf]
        %v203 = vld [vmem:[%s1 + $0x10] sm:$0xf]
        %v204 = vld [vmem:[%s1 + $0x14] sm:$0xf]
        %v205 = vld [vmem:[%s1 + $0x18] sm:$0xf]
        %v206 = vld [vmem:[%s1 + $0x1c] sm:$0xf]
        %v207 = vld [vmem:[%s1 + $0x20] sm:$0xf]
        %v208 = vld [vmem:[%s1 + $0x24] sm:$0xf]
        %v209 = vld [vmem:[%s1 + $0x28] sm:$0xf]
        %v210 = vld [vmem:[%s1 + $0x2c] sm:$0xf]
        %v211 = vld [vmem:[%s1 + $0x30] sm:$0xf]
        %v212 = vld [vmem:[%s1 + $0x34] sm:$0xf]
        %v213 = vld [vmem:[%s1 + $0x38] sm:$0xf]
        %v214 = vld [vmem:[%s1 + $0x3c] sm:$0xf]
        %v215 = vld [vmem:[%s1 + $0x40] sm:$0xf]
        %v216 = vld [vmem:[%s1 + $0x44] sm:$0xf]
        %v217 = vld [vmem:[%s1 + $0x48] sm:$0xf]
        %v218 = vld [vmem:[%s1 + $0x4c] sm:$0xf]
        %v219 = vld [vmem:[%s1 + $0x50] sm:$0xf]
        %v220 = vld [vmem:[%s1 + $0x54] sm:$0xf]
        %v221 = vld [vmem:[%s1 + $0x58] sm:$0xf]
        %v222 = vld [vmem:[%s1 + $0x5c] sm:$0xf]
        %v223 = vld [vmem:[%s1 + $0x60] sm:$0xf]
        %v224 = vld [vmem:[%s1 + $0x64] sm:$0xf]
        %v225 = vld [vmem:[%s1 + $0x68] sm:$0xf]
        %v226 = vld [vmem:[%s1 + $0x6c] sm:$0xf]
        %v227 = vld [vmem:[%s1 + $0x70] sm:$0xf]
        %v228 = vld [vmem:[%s1 + $0x74] sm:$0xf]
        %v229 = vld [vmem:[%s1 + $0x78] sm:$0xf]
        %v230 = vld [vmem:[%s1 + $0x7c] sm:$0xf]
        %v231 = vld [vmem:[%s1 + $0x80] sm:$0xf]
        %v232 = vld [vmem:[%s1 + $0x84] sm:$0xf]
        %v233 = vld [vmem:[%s1 + $0x88] sm:$0xf]
        %v234 = vld [vmem:[%s1 + $0x8c] sm:$0xf]
        %v235 = vld [vmem:[%s1 + $0x90] sm:$0xf]
        %v236 = vld [vmem:[%s1 + $0x94] sm:$0xf]
        %v237 = vld [vmem:[%s1 + $0x98] sm:$0xf]
        %v238 = vld [vmem:[%s1 + $0x9c] sm:$0xf]
        %v239 = vld [vmem:[%s1 + $0xa0] sm:$0xf]
        %v240 = vld [vmem:[%s1 + $0xa4] sm:$0xf]
        %v241 = vld [vmem:[%s1 + $0xa8] sm:$0xf]
        %v242 = vld [vmem:[%s1 + $0xac] sm:$0xf]
        %v243 = vld [vmem:[%s1 + $0xb0] sm:$0xf]
        %v244 = vld [vmem:[%s1 + $0xb4] sm:$0xf]
        %v245 = vld [vmem:[%s1 + $0xb8] sm:$0xf]
        %v246 = vld [vmem:[%s1 + $0xbc] sm:$0xf]
        %v247 = vld [vmem:[%s1 + $0xc0] sm:$0xf]
        %v248 = vld [vmem:[%s1 + $0xc4] sm:$0xf]
        %v249 = vld [vmem:[%s1 + $0xc8] sm:$0xf]
        %v250 = vld [vmem:[%s1 + $0xcc] sm:$0xf]
        %v251 = vld [vmem:[%s1 + $0xd0] sm:$0xf]
        %v252 = vld [vmem:[%s1 + $0xd4] sm:$0xf]
        %v253 = vld [vmem:[%s1 + $0xd8] sm:$0xf]
        %v254 = vld [vmem:[%s1 + $0xdc] sm:$0xf]
        %v255 = vld [vmem:[%s1 + $0xe0] sm:$0xf]
        %v256 = vld [vmem:[%s1 + $0xe4] sm:$0xf]
        %v257 = vld [vmem:[%s1 + $0xe8] sm:$0xf]
        %v258 = vld [vmem:[%s1 + $0xec] sm:$0xf]
        %v259 = vld [vmem:[%s1 + $0xf0] sm:$0xf]
        %v260 = vld [vmem:[%s1 + $0xf4] sm:$0xf]
        %v261 = vld [vmem:[%s1 + $0xf8] sm:$0xf]
        %v262 = vld [vmem:[%s1 + $0xfc] sm:$0xf]
        %v265 = vunpack.c.l.b16 %v197
        %v266 = vunpack.c.l.b16 %v198
        %v267 = vpack.c.b16 %v266, %v265
        %v276 = vunpack.c.l.b16 %v199
        %v277 = vunpack.c.l.b16 %v200
        %v278 = vunpack.c.l.b16 %v201
        %v279 = vunpack.c.l.b16 %v202
        %v280 = vunpack.c.l.b16 %v203
        %v281 = vunpack.c.l.b16 %v204
        %v282 = vunpack.c.l.b16 %v205
        %v283 = vunpack.c.l.b16 %v206
        %v284 = vpack.c.b16 %v277, %v276
        %v285 = vpack.c.b16 %v279, %v278
        %v286 = vpack.c.b16 %v281, %v280
        %v287 = vpack.c.b16 %v283, %v282
        %vm292 = vcmask 523264
        %v294 = vsel %vm292, %v267, 0
        %296 = vmatpush.bf16.msra.mxu0 0
        %297 = vmatpush.bf16.msra.mxu0 0
        %298 = vmatpush.bf16.msra.mxu0 0
        %299 = vmatpush.bf16.msra.mxu0 0
        %300 = vmatpush.bf16.msra.mxu0 %v287
        %301 = vmatpush.bf16.msra.mxu0 %v286
        %302 = vmatpush.bf16.msra.mxu0 %v285
        %303 = vmatpush.bf16.msra.mxu0 %v284
        %304 = vmatmul.bf16.gmra.mxu0 %v294
        %v305 = vpop.f32.mrf.mxu0
        %v306 = vadd.f32 0.0, %v305
        %v307 = vpop.f32.mrf.mxu0
        %v308 = vadd.f32 0.0, %v307
        %309 = vdwg.mxu0
        %v318 = vunpack.c.l.b16 %v207
        %v319 = vunpack.c.l.b16 %v208
        %v320 = vunpack.c.l.b16 %v209
        %v321 = vunpack.c.l.b16 %v210
        %v322 = vunpack.c.l.b16 %v211
        %v323 = vunpack.c.l.b16 %v212
        %v324 = vunpack.c.l.b16 %v213
        %v325 = vunpack.c.l.b16 %v214
        %v326 = vpack.c.b16 %v319, %v318
        %v327 = vpack.c.b16 %v321, %v320
        %v328 = vpack.c.b16 %v323, %v322
        %v329 = vpack.c.b16 %v325, %v324
        %334 = vmatpush.bf16.msra.mxu0 0
        %335 = vmatpush.bf16.msra.mxu0 0
        %336 = vmatpush.bf16.msra.mxu0 0
        %337 = vmatpush.bf16.msra.mxu0 0
        %338 = vmatpush.bf16.msra.mxu0 %v329
        %339 = vmatpush.bf16.msra.mxu0 %v328
        %340 = vmatpush.bf16.msra.mxu0 %v327
        %341 = vmatpush.bf16.msra.mxu0 %v326
        %342 = vmatmul.bf16.gmra.mxu0 %v294
        %v343 = vpop.f32.mrf.mxu0
        %v344 = vadd.f32 0.0, %v343
        %v345 = vpop.f32.mrf.mxu0
        %v346 = vadd.f32 0.0, %v345
        %347 = vdwg.mxu0
        %v356 = vunpack.c.l.b16 %v215
        %v357 = vunpack.c.l.b16 %v216
        %v358 = vunpack.c.l.b16 %v217
        %v359 = vunpack.c.l.b16 %v218
        %v360 = vunpack.c.l.b16 %v219
        %v361 = vunpack.c.l.b16 %v220
        %v362 = vunpack.c.l.b16 %v221
        %v363 = vunpack.c.l.b16 %v222
        %v364 = vpack.c.b16 %v357, %v356
        %v365 = vpack.c.b16 %v359, %v358
        %v366 = vpack.c.b16 %v361, %v360
        %v367 = vpack.c.b16 %v363, %v362
        %372 = vmatpush.bf16.msra.mxu0 0
        %373 = vmatpush.bf16.msra.mxu0 0
        %374 = vmatpush.bf16.msra.mxu0 0
        %375 = vmatpush.bf16.msra.mxu0 0
        %376 = vmatpush.bf16.msra.mxu0 %v367
        %377 = vmatpush.bf16.msra.mxu0 %v366
        %378 = vmatpush.bf16.msra.mxu0 %v365
        %379 = vmatpush.bf16.msra.mxu0 %v364
        %380 = vmatmul.bf16.gmra.mxu0 %v294
        %v381 = vpop.f32.mrf.mxu0
        %v382 = vadd.f32 0.0, %v381
        %v383 = vpop.f32.mrf.mxu0
        %v384 = vadd.f32 0.0, %v383
        %385 = vdwg.mxu0
        %v394 = vunpack.c.l.b16 %v223
        %v395 = vunpack.c.l.b16 %v224
        %v396 = vunpack.c.l.b16 %v225
        %v397 = vunpack.c.l.b16 %v226
        %v398 = vunpack.c.l.b16 %v227
        %v399 = vunpack.c.l.b16 %v228
        %v400 = vunpack.c.l.b16 %v229
        %v401 = vunpack.c.l.b16 %v230
        %v402 = vpack.c.b16 %v395, %v394
        %v403 = vpack.c.b16 %v397, %v396
        %v404 = vpack.c.b16 %v399, %v398
        %v405 = vpack.c.b16 %v401, %v400
        %410 = vmatpush.bf16.msra.mxu0 0
        %411 = vmatpush.bf16.msra.mxu0 0
        %412 = vmatpush.bf16.msra.mxu0 0
        %413 = vmatpush.bf16.msra.mxu0 0
        %414 = vmatpush.bf16.msra.mxu0 %v405
        %415 = vmatpush.bf16.msra.mxu0 %v404
        %416 = vmatpush.bf16.msra.mxu0 %v403
        %417 = vmatpush.bf16.msra.mxu0 %v402
        %418 = vmatmul.bf16.gmra.mxu0 %v294
        %v419 = vpop.f32.mrf.mxu0
        %v420 = vadd.f32 0.0, %v419
        %v421 = vpop.f32.mrf.mxu0
        %v422 = vadd.f32 0.0, %v421
        %423 = vdwg.mxu0
        %v432 = vunpack.c.l.b16 %v231
        %v433 = vunpack.c.l.b16 %v232
        %v434 = vunpack.c.l.b16 %v233
        %v435 = vunpack.c.l.b16 %v234
        %v436 = vunpack.c.l.b16 %v235
        %v437 = vunpack.c.l.b16 %v236
        %v438 = vunpack.c.l.b16 %v237
        %v439 = vunpack.c.l.b16 %v238
        %v440 = vpack.c.b16 %v433, %v432
        %v441 = vpack.c.b16 %v435, %v434
        %v442 = vpack.c.b16 %v437, %v436
        %v443 = vpack.c.b16 %v439, %v438
        %448 = vmatpush.bf16.msra.mxu0 0
        %449 = vmatpush.bf16.msra.mxu0 0
        %450 = vmatpush.bf16.msra.mxu0 0
        %451 = vmatpush.bf16.msra.mxu0 0
        %452 = vmatpush.bf16.msra.mxu0 %v443
        %453 = vmatpush.bf16.msra.mxu0 %v442
        %454 = vmatpush.bf16.msra.mxu0 %v441
        %455 = vmatpush.bf16.msra.mxu0 %v440
        %456 = vmatmul.bf16.gmra.mxu0 %v294
        %v457 = vpop.f32.mrf.mxu0
        %v458 = vadd.f32 0.0, %v457
        %v459 = vpop.f32.mrf.mxu0
        %v460 = vadd.f32 0.0, %v459
        %461 = vdwg.mxu0
        %v470 = vunpack.c.l.b16 %v239
        %v471 = vunpack.c.l.b16 %v240
        %v472 = vunpack.c.l.b16 %v241
        %v473 = vunpack.c.l.b16 %v242
        %v474 = vunpack.c.l.b16 %v243
        %v475 = vunpack.c.l.b16 %v244
        %v476 = vunpack.c.l.b16 %v245
        %v477 = vunpack.c.l.b16 %v246
        %v478 = vpack.c.b16 %v471, %v470
        %v479 = vpack.c.b16 %v473, %v472
        %v480 = vpack.c.b16 %v475, %v474
        %v481 = vpack.c.b16 %v477, %v476
        %486 = vmatpush.bf16.msra.mxu0 0
        %487 = vmatpush.bf16.msra.mxu0 0
        %488 = vmatpush.bf16.msra.mxu0 0
        %489 = vmatpush.bf16.msra.mxu0 0
        %490 = vmatpush.bf16.msra.mxu0 %v481
        %491 = vmatpush.bf16.msra.mxu0 %v480
        %492 = vmatpush.bf16.msra.mxu0 %v479
        %493 = vmatpush.bf16.msra.mxu0 %v478
        %494 = vmatmul.bf16.gmra.mxu0 %v294
        %v495 = vpop.f32.mrf.mxu0
        %v496 = vadd.f32 0.0, %v495
        %v497 = vpop.f32.mrf.mxu0
        %v498 = vadd.f32 0.0, %v497
        %499 = vdwg.mxu0
        %v508 = vunpack.c.l.b16 %v247
        %v509 = vunpack.c.l.b16 %v248
        %v510 = vunpack.c.l.b16 %v249
        %v511 = vunpack.c.l.b16 %v250
        %v512 = vunpack.c.l.b16 %v251
        %v513 = vunpack.c.l.b16 %v252
        %v514 = vunpack.c.l.b16 %v253
        %v515 = vunpack.c.l.b16 %v254
        %v516 = vpack.c.b16 %v509, %v508
        %v517 = vpack.c.b16 %v511, %v510
        %v518 = vpack.c.b16 %v513, %v512
        %v519 = vpack.c.b16 %v515, %v514
        %524 = vmatpush.bf16.msra.mxu0 0
        %525 = vmatpush.bf16.msra.mxu0 0
        %526 = vmatpush.bf16.msra.mxu0 0
        %527 = vmatpush.bf16.msra.mxu0 0
        %528 = vmatpush.bf16.msra.mxu0 %v519
        %529 = vmatpush.bf16.msra.mxu0 %v518
        %530 = vmatpush.bf16.msra.mxu0 %v517
        %531 = vmatpush.bf16.msra.mxu0 %v516
        %532 = vmatmul.bf16.gmra.mxu0 %v294
        %v533 = vpop.f32.mrf.mxu0
        %v534 = vadd.f32 0.0, %v533
        %v535 = vpop.f32.mrf.mxu0
        %v536 = vadd.f32 0.0, %v535
        %537 = vdwg.mxu0
        %v546 = vunpack.c.l.b16 %v255
        %v547 = vunpack.c.l.b16 %v256
        %v548 = vunpack.c.l.b16 %v257
        %v549 = vunpack.c.l.b16 %v258
        %v550 = vunpack.c.l.b16 %v259
        %v551 = vunpack.c.l.b16 %v260
        %v552 = vunpack.c.l.b16 %v261
        %v553 = vunpack.c.l.b16 %v262
        %v554 = vpack.c.b16 %v547, %v546
        %v555 = vpack.c.b16 %v549, %v548
        %v556 = vpack.c.b16 %v551, %v550
        %v557 = vpack.c.b16 %v553, %v552
        %562 = vmatpush.bf16.msra.mxu0 0
        %563 = vmatpush.bf16.msra.mxu0 0
        %564 = vmatpush.bf16.msra.mxu0 0
        %565 = vmatpush.bf16.msra.mxu0 0
        %566 = vmatpush.bf16.msra.mxu0 %v557
        %567 = vmatpush.bf16.msra.mxu0 %v556
        %568 = vmatpush.bf16.msra.mxu0 %v555
        %569 = vmatpush.bf16.msra.mxu0 %v554
        %570 = vmatmul.bf16.gmra.mxu0 %v294
        %v571 = vpop.f32.mrf.mxu0
        %v572 = vadd.f32 0.0, %v571
        %v573 = vpop.f32.mrf.mxu0
        %v574 = vadd.f32 0.0, %v573
        %575 = vdwg.mxu0
        %v576 = vpack.c.bf16 %v306, %v306
        %v577 = vpack.c.bf16 %v308, %v308
        %v578 = vpack.c.bf16 %v344, %v344
        %v579 = vpack.c.bf16 %v346, %v346
        %v580 = vpack.c.bf16 %v382, %v382
        %v581 = vpack.c.bf16 %v384, %v384
        %v582 = vpack.c.bf16 %v420, %v420
        %v583 = vpack.c.bf16 %v422, %v422
        %v584 = vpack.c.bf16 %v458, %v458
        %v585 = vpack.c.bf16 %v460, %v460
        %v586 = vpack.c.bf16 %v496, %v496
        %v587 = vpack.c.bf16 %v498, %v498
        %v588 = vpack.c.bf16 %v534, %v534
        %v589 = vpack.c.bf16 %v536, %v536
        %v590 = vpack.c.bf16 %v572, %v572
        %v591 = vpack.c.bf16 %v574, %v574
        %v594 = vunpack.c.l.b16 %v576
        %v595 = vunpack.c.l.b16 %v577
        %v596 = vpack.c.b16 %v595, %v594
        %597 = vrot.lane.b32.xlu0 %v596, 120
        %v598 = vpop.permute.xlu0 %597
        %vm599 = vcmask 64512
        %v601 = vsel %vm599, %v596, 0
        %v604 = vsel %vm599, %v598, 0
        %606 = vmatpush.bf16.xpose.msra.mxu0 0
        %607 = vmatpush.bf16.xpose.msra.mxu0 0
        %608 = vmatpush.bf16.xpose.msra.mxu0 0
        %609 = vmatpush.bf16.xpose.msra.mxu0 0
        %610 = vmatpush.bf16.xpose.msra.mxu0 0
        %611 = vmatpush.bf16.xpose.msra.mxu0 0
        %612 = vmatpush.bf16.xpose.msra.mxu0 0
        %613 = vmatpush.bf16.xpose.msra.mxu0 %v604
        %614 = vmatmul.bf16.gmra.mxu0 %v601
        %v615 = vpop.f32.mrf.mxu0
        %v616 = vadd.f32 0.0, %v615
        %v617 = vpop.f32.mrf.mxu0
        %v618 = vadd.f32 0.0, %v617
        %619 = vdwg.mxu0
        %v622 = vunpack.c.l.b16 %v578
        %v623 = vunpack.c.l.b16 %v579
        %v624 = vpack.c.b16 %v623, %v622
        %625 = vrot.lane.b32.xlu0 %v624, 120
        %v626 = vpop.permute.xlu0 %625
        %v628 = vsel %vm599, %v624, 0
        %v631 = vsel %vm599, %v626, 0
        %633 = vmatpush.bf16.xpose.msra.mxu0 0
        %634 = vmatpush.bf16.xpose.msra.mxu0 0
        %635 = vmatpush.bf16.xpose.msra.mxu0 0
        %636 = vmatpush.bf16.xpose.msra.mxu0 0
        %637 = vmatpush.bf16.xpose.msra.mxu0 0
        %638 = vmatpush.bf16.xpose.msra.mxu0 0
        %639 = vmatpush.bf16.xpose.msra.mxu0 0
        %640 = vmatpush.bf16.xpose.msra.mxu0 %v631
        %641 = vmatmul.bf16.gmra.mxu0 %v628
        %v642 = vpop.f32.mrf.mxu0
        %v643 = vadd.f32 0.0, %v642
        %v644 = vpop.f32.mrf.mxu0
        %v645 = vadd.f32 0.0, %v644
        %646 = vdwg.mxu0
        %v649 = vunpack.c.l.b16 %v580
        %v650 = vunpack.c.l.b16 %v581
        %v651 = vpack.c.b16 %v650, %v649
        %652 = vrot.lane.b32.xlu0 %v651, 120
        %v653 = vpop.permute.xlu0 %652
        %v655 = vsel %vm599, %v651, 0
        %v658 = vsel %vm599, %v653, 0
        %660 = vmatpush.bf16.xpose.msra.mxu0 0
        %661 = vmatpush.bf16.xpose.msra.mxu0 0
        %662 = vmatpush.bf16.xpose.msra.mxu0 0
        %663 = vmatpush.bf16.xpose.msra.mxu0 0
        %664 = vmatpush.bf16.xpose.msra.mxu0 0
        %665 = vmatpush.bf16.xpose.msra.mxu0 0
        %666 = vmatpush.bf16.xpose.msra.mxu0 0
        %667 = vmatpush.bf16.xpose.msra.mxu0 %v658
        %668 = vmatmul.bf16.gmra.mxu0 %v655
        %v669 = vpop.f32.mrf.mxu0
        %v670 = vadd.f32 0.0, %v669
        %v671 = vpop.f32.mrf.mxu0
        %v672 = vadd.f32 0.0, %v671
        %673 = vdwg.mxu0
        %v676 = vunpack.c.l.b16 %v582
        %v677 = vunpack.c.l.b16 %v583
        %v678 = vpack.c.b16 %v677, %v676
        %679 = vrot.lane.b32.xlu0 %v678, 120
        %v680 = vpop.permute.xlu0 %679
        %v682 = vsel %vm599, %v678, 0
        %v685 = vsel %vm599, %v680, 0
        %687 = vmatpush.bf16.xpose.msra.mxu0 0
        %688 = vmatpush.bf16.xpose.msra.mxu0 0
        %689 = vmatpush.bf16.xpose.msra.mxu0 0
        %690 = vmatpush.bf16.xpose.msra.mxu0 0
        %691 = vmatpush.bf16.xpose.msra.mxu0 0
        %692 = vmatpush.bf16.xpose.msra.mxu0 0
        %693 = vmatpush.bf16.xpose.msra.mxu0 0
        %694 = vmatpush.bf16.xpose.msra.mxu0 %v685
        %695 = vmatmul.bf16.gmra.mxu0 %v682
        %v696 = vpop.f32.mrf.mxu0
        %v697 = vadd.f32 0.0, %v696
        %v698 = vpop.f32.mrf.mxu0
        %v699 = vadd.f32 0.0, %v698
        %700 = vdwg.mxu0
        %v703 = vunpack.c.l.b16 %v584
        %v704 = vunpack.c.l.b16 %v585
        %v705 = vpack.c.b16 %v704, %v703
        %706 = vrot.lane.b32.xlu0 %v705, 120
        %v707 = vpop.permute.xlu0 %706
        %v709 = vsel %vm599, %v705, 0
        %v712 = vsel %vm599, %v707, 0
        %714 = vmatpush.bf16.xpose.msra.mxu0 0
        %715 = vmatpush.bf16.xpose.msra.mxu0 0
        %716 = vmatpush.bf16.xpose.msra.mxu0 0
        %717 = vmatpush.bf16.xpose.msra.mxu0 0
        %718 = vmatpush.bf16.xpose.msra.mxu0 0
        %719 = vmatpush.bf16.xpose.msra.mxu0 0
        %720 = vmatpush.bf16.xpose.msra.mxu0 0
        %721 = vmatpush.bf16.xpose.msra.mxu0 %v712
        %722 = vmatmul.bf16.gmra.mxu0 %v709
        %v723 = vpop.f32.mrf.mxu0
        %v724 = vadd.f32 0.0, %v723
        %v725 = vpop.f32.mrf.mxu0
        %v726 = vadd.f32 0.0, %v725
        %727 = vdwg.mxu0
        %v730 = vunpack.c.l.b16 %v586
        %v731 = vunpack.c.l.b16 %v587
        %v732 = vpack.c.b16 %v731, %v730
        %733 = vrot.lane.b32.xlu0 %v732, 120
        %v734 = vpop.permute.xlu0 %733
        %v736 = vsel %vm599, %v732, 0
        %v739 = vsel %vm599, %v734, 0
        %741 = vmatpush.bf16.xpose.msra.mxu0 0
        %742 = vmatpush.bf16.xpose.msra.mxu0 0
        %743 = vmatpush.bf16.xpose.msra.mxu0 0
        %744 = vmatpush.bf16.xpose.msra.mxu0 0
        %745 = vmatpush.bf16.xpose.msra.mxu0 0
        %746 = vmatpush.bf16.xpose.msra.mxu0 0
        %747 = vmatpush.bf16.xpose.msra.mxu0 0
        %748 = vmatpush.bf16.xpose.msra.mxu0 %v739
        %749 = vmatmul.bf16.gmra.mxu0 %v736
        %v750 = vpop.f32.mrf.mxu0
        %v751 = vadd.f32 0.0, %v750
        %v752 = vpop.f32.mrf.mxu0
        %v753 = vadd.f32 0.0, %v752
        %754 = vdwg.mxu0
        %v757 = vunpack.c.l.b16 %v588
        %v758 = vunpack.c.l.b16 %v589
        %v759 = vpack.c.b16 %v758, %v757
        %760 = vrot.lane.b32.xlu0 %v759, 120
        %v761 = vpop.permute.xlu0 %760
        %v763 = vsel %vm599, %v759, 0
        %v766 = vsel %vm599, %v761, 0
        %768 = vmatpush.bf16.xpose.msra.mxu0 0
        %769 = vmatpush.bf16.xpose.msra.mxu0 0
        %770 = vmatpush.bf16.xpose.msra.mxu0 0
        %771 = vmatpush.bf16.xpose.msra.mxu0 0
        %772 = vmatpush.bf16.xpose.msra.mxu0 0
        %773 = vmatpush.bf16.xpose.msra.mxu0 0
        %774 = vmatpush.bf16.xpose.msra.mxu0 0
        %775 = vmatpush.bf16.xpose.msra.mxu0 %v766
        %776 = vmatmul.bf16.gmra.mxu0 %v763
        %v777 = vpop.f32.mrf.mxu0
        %v778 = vadd.f32 0.0, %v777
        %v779 = vpop.f32.mrf.mxu0
        %v780 = vadd.f32 0.0, %v779
        %781 = vdwg.mxu0
        %v784 = vunpack.c.l.b16 %v590
        %v785 = vunpack.c.l.b16 %v591
        %v786 = vpack.c.b16 %v785, %v784
        %787 = vrot.lane.b32.xlu0 %v786, 120
        %v788 = vpop.permute.xlu0 %787
        %v790 = vsel %vm599, %v786, 0
        %v793 = vsel %vm599, %v788, 0
        %795 = vmatpush.bf16.xpose.msra.mxu0 0
        %796 = vmatpush.bf16.xpose.msra.mxu0 0
        %797 = vmatpush.bf16.xpose.msra.mxu0 0
        %798 = vmatpush.bf16.xpose.msra.mxu0 0
        %799 = vmatpush.bf16.xpose.msra.mxu0 0
        %800 = vmatpush.bf16.xpose.msra.mxu0 0
        %801 = vmatpush.bf16.xpose.msra.mxu0 0
        %802 = vmatpush.bf16.xpose.msra.mxu0 %v793
        %803 = vmatmul.bf16.gmra.mxu0 %v790
        %v804 = vpop.f32.mrf.mxu0
        %v805 = vadd.f32 0.0, %v804
        %v806 = vpop.f32.mrf.mxu0
        %v807 = vadd.f32 0.0, %v806
        %808 = vdwg.mxu0
        %vm809 = vcmask 130048
        %v810 = vsel %vm809, %v616, -inf
        %811 = vmax.xlane.f32.xlu0 %v810
        %v812 = vpop.xlane.xlu0 %811
        %v813 = vsel %vm809, %v618, -inf
        %814 = vmax.xlane.f32.xlu0 %v813
        %v815 = vpop.xlane.xlu0 %814
        %v816 = vsel %vm809, %v643, -inf
        %817 = vmax.xlane.f32.xlu0 %v816
        %v818 = vpop.xlane.xlu0 %817
        %v819 = vsel %vm809, %v645, -inf
        %820 = vmax.xlane.f32.xlu0 %v819
        %v821 = vpop.xlane.xlu0 %820
        %v822 = vsel %vm809, %v670, -inf
        %823 = vmax.xlane.f32.xlu0 %v822
        %v824 = vpop.xlane.xlu0 %823
        %v825 = vsel %vm809, %v672, -inf
        %826 = vmax.xlane.f32.xlu0 %v825
        %v827 = vpop.xlane.xlu0 %826
        %v828 = vsel %vm809, %v697, -inf
        %829 = vmax.xlane.f32.xlu0 %v828
        %v830 = vpop.xlane.xlu0 %829
        %v831 = vsel %vm809, %v699, -inf
        %832 = vmax.xlane.f32.xlu0 %v831
        %v833 = vpop.xlane.xlu0 %832
        %v834 = vsel %vm809, %v724, -inf
        %835 = vmax.xlane.f32.xlu0 %v834
        %v836 = vpop.xlane.xlu0 %835
        %v837 = vsel %vm809, %v726, -inf
        %838 = vmax.xlane.f32.xlu0 %v837
        %v839 = vpop.xlane.xlu0 %838
        %v840 = vsel %vm809, %v751, -inf
        %841 = vmax.xlane.f32.xlu0 %v840
        %v842 = vpop.xlane.xlu0 %841
        %v843 = vsel %vm809, %v753, -inf
        %844 = vmax.xlane.f32.xlu0 %v843
        %v845 = vpop.xlane.xlu0 %844
        %v846 = vsel %vm809, %v778, -inf
        %847 = vmax.xlane.f32.xlu0 %v846
        %v848 = vpop.xlane.xlu0 %847
        %v849 = vsel %vm809, %v780, -inf
        %850 = vmax.xlane.f32.xlu0 %v849
        %v851 = vpop.xlane.xlu0 %850
        %v852 = vsel %vm809, %v805, -inf
        %853 = vmax.xlane.f32.xlu0 %v852
        %v854 = vpop.xlane.xlu0 %853
        %v855 = vsel %vm809, %v807, -inf
        %856 = vmax.xlane.f32.xlu0 %v855
        %v857 = vpop.xlane.xlu0 %856
        %v858 = vsub.f32 %v616, %v812
        %v859 = vsub.f32 %v618, %v815
        %v860 = vsub.f32 %v643, %v818
        %v861 = vsub.f32 %v645, %v821
        %v862 = vsub.f32 %v670, %v824
        %v863 = vsub.f32 %v672, %v827
        %v864 = vsub.f32 %v697, %v830
        %v865 = vsub.f32 %v699, %v833
        %v866 = vsub.f32 %v724, %v836
        %v867 = vsub.f32 %v726, %v839
        %v868 = vsub.f32 %v751, %v842
        %v869 = vsub.f32 %v753, %v845
        %v870 = vsub.f32 %v778, %v848
        %v871 = vsub.f32 %v780, %v851
        %v872 = vsub.f32 %v805, %v854
        %v873 = vsub.f32 %v807, %v857
        %v874 = vmul.f32 %v858, 1.442695
        %v875 = vpow.pop %v874
        %v876 = vmul.f32 %v859, 1.442695
        %v877 = vpow.pop %v876
        %v878 = vmul.f32 %v860, 1.442695
        %v879 = vpow.pop %v878
        %v880 = vmul.f32 %v861, 1.442695
        %v881 = vpow.pop %v880
        %v882 = vmul.f32 %v862, 1.442695
        %v883 = vpow.pop %v882
        %v884 = vmul.f32 %v863, 1.442695
        %v885 = vpow.pop %v884
        %v886 = vmul.f32 %v864, 1.442695
        %v887 = vpow.pop %v886
        %v888 = vmul.f32 %v865, 1.442695
        %v889 = vpow.pop %v888
        %v890 = vmul.f32 %v866, 1.442695
        %v891 = vpow.pop %v890
        %v892 = vmul.f32 %v867, 1.442695
        %v893 = vpow.pop %v892
        %v894 = vmul.f32 %v868, 1.442695
        %v895 = vpow.pop %v894
        %v896 = vmul.f32 %v869, 1.442695
        %v897 = vpow.pop %v896
        %v898 = vmul.f32 %v870, 1.442695
        %v899 = vpow.pop %v898
        %v900 = vmul.f32 %v871, 1.442695
        %v901 = vpow.pop %v900
        %v902 = vmul.f32 %v872, 1.442695
        %v903 = vpow.pop %v902
        %v904 = vmul.f32 %v873, 1.442695
        %v905 = vpow.pop %v904
        %v906 = vsel %vm809, %v875, 0.0
        %907 = vadd.xlane.f32.xlu0 %v906
        %v908 = vpop.xlane.xlu0 %907
        %v909 = vsel %vm809, %v877, 0.0
        %910 = vadd.xlane.f32.xlu0 %v909
        %v911 = vpop.xlane.xlu0 %910
        %v912 = vsel %vm809, %v879, 0.0
        %913 = vadd.xlane.f32.xlu0 %v912
        %v914 = vpop.xlane.xlu0 %913
        %v915 = vsel %vm809, %v881, 0.0
        %916 = vadd.xlane.f32.xlu0 %v915
        %v917 = vpop.xlane.xlu0 %916
        %v918 = vsel %vm809, %v883, 0.0
        %919 = vadd.xlane.f32.xlu0 %v918
        %v920 = vpop.xlane.xlu0 %919
        %v921 = vsel %vm809, %v885, 0.0
        %922 = vadd.xlane.f32.xlu0 %v921
        %v923 = vpop.xlane.xlu0 %922
        %v924 = vsel %vm809, %v887, 0.0
        %925 = vadd.xlane.f32.xlu0 %v924
        %v926 = vpop.xlane.xlu0 %925
        %v927 = vsel %vm809, %v889, 0.0
        %928 = vadd.xlane.f32.xlu0 %v927
        %v929 = vpop.xlane.xlu0 %928
        %v930 = vsel %vm809, %v891, 0.0
        %931 = vadd.xlane.f32.xlu0 %v930
        %v932 = vpop.xlane.xlu0 %931
        %v933 = vsel %vm809, %v893, 0.0
        %934 = vadd.xlane.f32.xlu0 %v933
        %v935 = vpop.xlane.xlu0 %934
        %v936 = vsel %vm809, %v895, 0.0
        %937 = vadd.xlane.f32.xlu0 %v936
        %v938 = vpop.xlane.xlu0 %937
        %v939 = vsel %vm809, %v897, 0.0
        %940 = vadd.xlane.f32.xlu0 %v939
        %v941 = vpop.xlane.xlu0 %940
        %v942 = vsel %vm809, %v899, 0.0
        %943 = vadd.xlane.f32.xlu0 %v942
        %v944 = vpop.xlane.xlu0 %943
        %v945 = vsel %vm809, %v901, 0.0
        %946 = vadd.xlane.f32.xlu0 %v945
        %v947 = vpop.xlane.xlu0 %946
        %v948 = vsel %vm809, %v903, 0.0
        %949 = vadd.xlane.f32.xlu0 %v948
        %v950 = vpop.xlane.xlu0 %949
        %v951 = vsel %vm809, %v905, 0.0
        %952 = vadd.xlane.f32.xlu0 %v951
        %v953 = vpop.xlane.xlu0 %952
        %v954 = vpack.c.bf16 %v875, %v875
        %v955 = vpack.c.bf16 %v877, %v877
        %v956 = vpack.c.bf16 %v879, %v879
        %v957 = vpack.c.bf16 %v881, %v881
        %v958 = vpack.c.bf16 %v883, %v883
        %v959 = vpack.c.bf16 %v885, %v885
        %v960 = vpack.c.bf16 %v887, %v887
        %v961 = vpack.c.bf16 %v889, %v889
        %v962 = vpack.c.bf16 %v891, %v891
        %v963 = vpack.c.bf16 %v893, %v893
        %v964 = vpack.c.bf16 %v895, %v895
        %v965 = vpack.c.bf16 %v897, %v897
        %v966 = vpack.c.bf16 %v899, %v899
        %v967 = vpack.c.bf16 %v901, %v901
        %v968 = vpack.c.bf16 %v903, %v903
        %v969 = vpack.c.bf16 %v905, %v905
        %v972 = vunpack.c.l.b16 %v954
        %v973 = vunpack.c.l.b16 %v955
        %v974 = vpack.c.b16 %v973, %v972
        %975 = vrot.lane.b32.xlu0 %v596, 112
        %v976 = vpop.permute.xlu0 %975
        %v979 = vsel %vm809, %v974, 0
        %981 = vmatpush.bf16.msra.mxu0 0
        %982 = vmatpush.bf16.msra.mxu0 0
        %983 = vmatpush.bf16.msra.mxu0 0
        %984 = vmatpush.bf16.msra.mxu0 0
        %985 = vmatpush.bf16.msra.mxu0 0
        %986 = vmatpush.bf16.msra.mxu0 0
        %987 = vmatpush.bf16.msra.mxu0 0
        %988 = vmatpush.bf16.msra.mxu0 %v976
        %989 = vmatmul.bf16.gmra.mxu0 %v979
        %v990 = vpop.f32.mrf.mxu0
        %v991 = vadd.f32 0.0, %v990
        %v992 = vpop.f32.mrf.mxu0
        %v993 = vadd.f32 0.0, %v992
        %994 = vdwg.mxu0
        %v997 = vunpack.c.l.b16 %v956
        %v998 = vunpack.c.l.b16 %v957
        %v999 = vpack.c.b16 %v998, %v997
        %1000 = vrot.lane.b32.xlu0 %v624, 112
        %v1001 = vpop.permute.xlu0 %1000
        %v1004 = vsel %vm809, %v999, 0
        %1006 = vmatpush.bf16.msra.mxu0 0
        %1007 = vmatpush.bf16.msra.mxu0 0
        %1008 = vmatpush.bf16.msra.mxu0 0
        %1009 = vmatpush.bf16.msra.mxu0 0
        %1010 = vmatpush.bf16.msra.mxu0 0
        %1011 = vmatpush.bf16.msra.mxu0 0
        %1012 = vmatpush.bf16.msra.mxu0 0
        %1013 = vmatpush.bf16.msra.mxu0 %v1001
        %1014 = vmatmul.bf16.gmra.mxu0 %v1004
        %v1015 = vpop.f32.mrf.mxu0
        %v1016 = vadd.f32 0.0, %v1015
        %v1017 = vpop.f32.mrf.mxu0
        %v1018 = vadd.f32 0.0, %v1017
        %1019 = vdwg.mxu0
        %v1022 = vunpack.c.l.b16 %v958
        %v1023 = vunpack.c.l.b16 %v959
        %v1024 = vpack.c.b16 %v1023, %v1022
        %1025 = vrot.lane.b32.xlu0 %v651, 112
        %v1026 = vpop.permute.xlu0 %1025
        %v1029 = vsel %vm809, %v1024, 0
        %1031 = vmatpush.bf16.msra.mxu0 0
        %1032 = vmatpush.bf16.msra.mxu0 0
        %1033 = vmatpush.bf16.msra.mxu0 0
        %1034 = vmatpush.bf16.msra.mxu0 0
        %1035 = vmatpush.bf16.msra.mxu0 0
        %1036 = vmatpush.bf16.msra.mxu0 0
        %1037 = vmatpush.bf16.msra.mxu0 0
        %1038 = vmatpush.bf16.msra.mxu0 %v1026
        %1039 = vmatmul.bf16.gmra.mxu0 %v1029
        %v1040 = vpop.f32.mrf.mxu0
        %v1041 = vadd.f32 0.0, %v1040
        %v1042 = vpop.f32.mrf.mxu0
        %v1043 = vadd.f32 0.0, %v1042
        %1044 = vdwg.mxu0
        %v1047 = vunpack.c.l.b16 %v960
        %v1048 = vunpack.c.l.b16 %v961
        %v1049 = vpack.c.b16 %v1048, %v1047
        %1050 = vrot.lane.b32.xlu0 %v678, 112
        %v1051 = vpop.permute.xlu0 %1050
        %v1054 = vsel %vm809, %v1049, 0
        %1056 = vmatpush.bf16.msra.mxu0 0
        %1057 = vmatpush.bf16.msra.mxu0 0
        %1058 = vmatpush.bf16.msra.mxu0 0
        %1059 = vmatpush.bf16.msra.mxu0 0
        %1060 = vmatpush.bf16.msra.mxu0 0
        %1061 = vmatpush.bf16.msra.mxu0 0
        %1062 = vmatpush.bf16.msra.mxu0 0
        %1063 = vmatpush.bf16.msra.mxu0 %v1051
        %1064 = vmatmul.bf16.gmra.mxu0 %v1054
        %v1065 = vpop.f32.mrf.mxu0
        %v1066 = vadd.f32 0.0, %v1065
        %v1067 = vpop.f32.mrf.mxu0
        %v1068 = vadd.f32 0.0, %v1067
        %1069 = vdwg.mxu0
        %v1072 = vunpack.c.l.b16 %v962
        %v1073 = vunpack.c.l.b16 %v963
        %v1074 = vpack.c.b16 %v1073, %v1072
        %1075 = vrot.lane.b32.xlu0 %v705, 112
        %v1076 = vpop.permute.xlu0 %1075
        %v1079 = vsel %vm809, %v1074, 0
        %1081 = vmatpush.bf16.msra.mxu0 0
        %1082 = vmatpush.bf16.msra.mxu0 0
        %1083 = vmatpush.bf16.msra.mxu0 0
        %1084 = vmatpush.bf16.msra.mxu0 0
        %1085 = vmatpush.bf16.msra.mxu0 0
        %1086 = vmatpush.bf16.msra.mxu0 0
        %1087 = vmatpush.bf16.msra.mxu0 0
        %1088 = vmatpush.bf16.msra.mxu0 %v1076
        %1089 = vmatmul.bf16.gmra.mxu0 %v1079
        %v1090 = vpop.f32.mrf.mxu0
        %v1091 = vadd.f32 0.0, %v1090
        %v1092 = vpop.f32.mrf.mxu0
        %v1093 = vadd.f32 0.0, %v1092
        %1094 = vdwg.mxu0
        %v1097 = vunpack.c.l.b16 %v964
        %v1098 = vunpack.c.l.b16 %v965
        %v1099 = vpack.c.b16 %v1098, %v1097
        %1100 = vrot.lane.b32.xlu0 %v732, 112
        %v1101 = vpop.permute.xlu0 %1100
        %v1104 = vsel %vm809, %v1099, 0
        %1106 = vmatpush.bf16.msra.mxu0 0
        %1107 = vmatpush.bf16.msra.mxu0 0
        %1108 = vmatpush.bf16.msra.mxu0 0
        %1109 = vmatpush.bf16.msra.mxu0 0
        %1110 = vmatpush.bf16.msra.mxu0 0
        %1111 = vmatpush.bf16.msra.mxu0 0
        %1112 = vmatpush.bf16.msra.mxu0 0
        %1113 = vmatpush.bf16.msra.mxu0 %v1101
        %1114 = vmatmul.bf16.gmra.mxu0 %v1104
        %v1115 = vpop.f32.mrf.mxu0
        %v1116 = vadd.f32 0.0, %v1115
        %v1117 = vpop.f32.mrf.mxu0
        %v1118 = vadd.f32 0.0, %v1117
        %1119 = vdwg.mxu0
        %v1122 = vunpack.c.l.b16 %v966
        %v1123 = vunpack.c.l.b16 %v967
        %v1124 = vpack.c.b16 %v1123, %v1122
        %1125 = vrot.lane.b32.xlu0 %v759, 112
        %v1126 = vpop.permute.xlu0 %1125
        %v1129 = vsel %vm809, %v1124, 0
        %1131 = vmatpush.bf16.msra.mxu0 0
        %1132 = vmatpush.bf16.msra.mxu0 0
        %1133 = vmatpush.bf16.msra.mxu0 0
        %1134 = vmatpush.bf16.msra.mxu0 0
        %1135 = vmatpush.bf16.msra.mxu0 0
        %1136 = vmatpush.bf16.msra.mxu0 0
        %1137 = vmatpush.bf16.msra.mxu0 0
        %1138 = vmatpush.bf16.msra.mxu0 %v1126
        %1139 = vmatmul.bf16.gmra.mxu0 %v1129
        %v1140 = vpop.f32.mrf.mxu0
        %v1141 = vadd.f32 0.0, %v1140
        %v1142 = vpop.f32.mrf.mxu0
        %v1143 = vadd.f32 0.0, %v1142
        %1144 = vdwg.mxu0
        %v1147 = vunpack.c.l.b16 %v968
        %v1148 = vunpack.c.l.b16 %v969
        %v1149 = vpack.c.b16 %v1148, %v1147
        %1150 = vrot.lane.b32.xlu0 %v786, 112
        %v1151 = vpop.permute.xlu0 %1150
        %v1154 = vsel %vm809, %v1149, 0
        %1156 = vmatpush.bf16.msra.mxu0 0
        %1157 = vmatpush.bf16.msra.mxu0 0
        %1158 = vmatpush.bf16.msra.mxu0 0
        %1159 = vmatpush.bf16.msra.mxu0 0
        %1160 = vmatpush.bf16.msra.mxu0 0
        %1161 = vmatpush.bf16.msra.mxu0 0
        %1162 = vmatpush.bf16.msra.mxu0 0
        %1163 = vmatpush.bf16.msra.mxu0 %v1151
        %1164 = vmatmul.bf16.gmra.mxu0 %v1154
        %v1165 = vpop.f32.mrf.mxu0
        %v1166 = vadd.f32 0.0, %v1165
        %v1167 = vpop.f32.mrf.mxu0
        %v1168 = vadd.f32 0.0, %v1167
        %1169 = vdwg.mxu0
        %v1170 = vrcp.pop %v908
        %v1171 = vrcp.pop %v911
        %v1172 = vrcp.pop %v914
        %v1173 = vrcp.pop %v917
        %v1174 = vrcp.pop %v920
        %v1175 = vrcp.pop %v923
        %v1176 = vrcp.pop %v926
        %v1177 = vrcp.pop %v929
        %v1178 = vrcp.pop %v932
        %v1179 = vrcp.pop %v935
        %v1180 = vrcp.pop %v938
        %v1181 = vrcp.pop %v941
        %v1182 = vrcp.pop %v944
        %v1183 = vrcp.pop %v947
        %v1184 = vrcp.pop %v950
        %v1185 = vrcp.pop %v953
        %v1186 = vmul.f32 %v991, %v1170
        %v1187 = vmul.f32 %v993, %v1171
        %v1188 = vmul.f32 %v1016, %v1172
        %v1189 = vmul.f32 %v1018, %v1173
        %v1190 = vmul.f32 %v1041, %v1174
        %v1191 = vmul.f32 %v1043, %v1175
        %v1192 = vmul.f32 %v1066, %v1176
        %v1193 = vmul.f32 %v1068, %v1177
        %v1194 = vmul.f32 %v1091, %v1178
        %v1195 = vmul.f32 %v1093, %v1179
        %v1196 = vmul.f32 %v1116, %v1180
        %v1197 = vmul.f32 %v1118, %v1181
        %v1198 = vmul.f32 %v1141, %v1182
        %v1199 = vmul.f32 %v1143, %v1183
        %v1200 = vmul.f32 %v1166, %v1184
        %v1201 = vmul.f32 %v1168, %v1185
        %v1202 = vpack.c.bf16 %v1186, %v1186
        %v1203 = vpack.c.bf16 %v1187, %v1187
        %v1204 = vpack.c.bf16 %v1188, %v1188
        %v1205 = vpack.c.bf16 %v1189, %v1189
        %v1206 = vpack.c.bf16 %v1190, %v1190
        %v1207 = vpack.c.bf16 %v1191, %v1191
        %v1208 = vpack.c.bf16 %v1192, %v1192
        %v1209 = vpack.c.bf16 %v1193, %v1193
        %v1210 = vpack.c.bf16 %v1194, %v1194
        %v1211 = vpack.c.bf16 %v1195, %v1195
        %v1212 = vpack.c.bf16 %v1196, %v1196
        %v1213 = vpack.c.bf16 %v1197, %v1197
        %v1214 = vpack.c.bf16 %v1198, %v1198
        %v1215 = vpack.c.bf16 %v1199, %v1199
        %v1216 = vpack.c.bf16 %v1200, %v1200
        %v1217 = vpack.c.bf16 %v1201, %v1201
        %v1218 = vld [vmem:[%s2] sm:$0xf]
        %v1219 = vld [vmem:[%s2 + $0x4] sm:$0xf]
        %v1220 = vld [vmem:[%s2 + $0x8] sm:$0xf]
        %v1221 = vld [vmem:[%s2 + $0xc] sm:$0xf]
        %v1222 = vld [vmem:[%s2 + $0x10] sm:$0xf]
        %v1223 = vld [vmem:[%s2 + $0x14] sm:$0xf]
        %v1224 = vld [vmem:[%s2 + $0x18] sm:$0xf]
        %v1225 = vld [vmem:[%s2 + $0x1c] sm:$0xf]
        %v1228 = vunpack.c.l.b16 %v1202
        %v1229 = vunpack.c.l.b16 %v1203
        %v1230 = vpack.c.b16 %v1229, %v1228
        %v1232 = vsel %vm599, %v1230, 0
        %vm1234 = vcmask 1043456
        %v1236 = vsel %vm1234, %v1218, 0
        %1238 = vmatpush.bf16.msra.mxu0 0
        %1239 = vmatpush.bf16.msra.mxu0 0
        %1240 = vmatpush.bf16.msra.mxu0 0
        %1241 = vmatpush.bf16.msra.mxu0 0
        %1242 = vmatpush.bf16.msra.mxu0 0
        %1243 = vmatpush.bf16.msra.mxu0 0
        %1244 = vmatpush.bf16.msra.mxu0 0
        %1245 = vmatpush.bf16.msra.mxu0 %v1236
        %1246 = vmatmul.bf16.gmra.mxu0 %v1232
        %v1247 = vpop.f32.mrf.mxu0
        %v1248 = vadd.f32 0.0, %v1247
        %v1249 = vpop.f32.mrf.mxu0
        %v1250 = vadd.f32 0.0, %v1249
        %1251 = vdwg.mxu0
        %v1254 = vunpack.c.l.b16 %v1204
        %v1255 = vunpack.c.l.b16 %v1205
        %v1256 = vpack.c.b16 %v1255, %v1254
        %v1258 = vsel %vm599, %v1256, 0
        %v1261 = vsel %vm1234, %v1219, 0
        %1263 = vmatpush.bf16.msra.mxu0 0
        %1264 = vmatpush.bf16.msra.mxu0 0
        %1265 = vmatpush.bf16.msra.mxu0 0
        %1266 = vmatpush.bf16.msra.mxu0 0
        %1267 = vmatpush.bf16.msra.mxu0 0
        %1268 = vmatpush.bf16.msra.mxu0 0
        %1269 = vmatpush.bf16.msra.mxu0 0
        %1270 = vmatpush.bf16.msra.mxu0 %v1261
        %1271 = vmatmul.bf16.gmra.mxu0 %v1258
        %v1272 = vpop.f32.mrf.mxu0
        %v1273 = vadd.f32 0.0, %v1272
        %v1274 = vpop.f32.mrf.mxu0
        %v1275 = vadd.f32 0.0, %v1274
        %1276 = vdwg.mxu0
        %v1279 = vunpack.c.l.b16 %v1206
        %v1280 = vunpack.c.l.b16 %v1207
        %v1281 = vpack.c.b16 %v1280, %v1279
        %v1283 = vsel %vm599, %v1281, 0
        %v1286 = vsel %vm1234, %v1220, 0
        %1288 = vmatpush.bf16.msra.mxu0 0
        %1289 = vmatpush.bf16.msra.mxu0 0
        %1290 = vmatpush.bf16.msra.mxu0 0
        %1291 = vmatpush.bf16.msra.mxu0 0
        %1292 = vmatpush.bf16.msra.mxu0 0
        %1293 = vmatpush.bf16.msra.mxu0 0
        %1294 = vmatpush.bf16.msra.mxu0 0
        %1295 = vmatpush.bf16.msra.mxu0 %v1286
        %1296 = vmatmul.bf16.gmra.mxu0 %v1283
        %v1297 = vpop.f32.mrf.mxu0
        %v1298 = vadd.f32 0.0, %v1297
        %v1299 = vpop.f32.mrf.mxu0
        %v1300 = vadd.f32 0.0, %v1299
        %1301 = vdwg.mxu0
        %v1304 = vunpack.c.l.b16 %v1208
        %v1305 = vunpack.c.l.b16 %v1209
        %v1306 = vpack.c.b16 %v1305, %v1304
        %v1308 = vsel %vm599, %v1306, 0
        %v1311 = vsel %vm1234, %v1221, 0
        %1313 = vmatpush.bf16.msra.mxu0 0
        %1314 = vmatpush.bf16.msra.mxu0 0
        %1315 = vmatpush.bf16.msra.mxu0 0
        %1316 = vmatpush.bf16.msra.mxu0 0
        %1317 = vmatpush.bf16.msra.mxu0 0
        %1318 = vmatpush.bf16.msra.mxu0 0
        %1319 = vmatpush.bf16.msra.mxu0 0
        %1320 = vmatpush.bf16.msra.mxu0 %v1311
        %1321 = vmatmul.bf16.gmra.mxu0 %v1308
        %v1322 = vpop.f32.mrf.mxu0
        %v1323 = vadd.f32 0.0, %v1322
        %v1324 = vpop.f32.mrf.mxu0
        %v1325 = vadd.f32 0.0, %v1324
        %1326 = vdwg.mxu0
        %v1329 = vunpack.c.l.b16 %v1210
        %v1330 = vunpack.c.l.b16 %v1211
        %v1331 = vpack.c.b16 %v1330, %v1329
        %v1333 = vsel %vm599, %v1331, 0
        %v1336 = vsel %vm1234, %v1222, 0
        %1338 = vmatpush.bf16.msra.mxu0 0
        %1339 = vmatpush.bf16.msra.mxu0 0
        %1340 = vmatpush.bf16.msra.mxu0 0
        %1341 = vmatpush.bf16.msra.mxu0 0
        %1342 = vmatpush.bf16.msra.mxu0 0
        %1343 = vmatpush.bf16.msra.mxu0 0
        %1344 = vmatpush.bf16.msra.mxu0 0
        %1345 = vmatpush.bf16.msra.mxu0 %v1336
        %1346 = vmatmul.bf16.gmra.mxu0 %v1333
        %v1347 = vpop.f32.mrf.mxu0
        %v1348 = vadd.f32 0.0, %v1347
        %v1349 = vpop.f32.mrf.mxu0
        %v1350 = vadd.f32 0.0, %v1349
        %1351 = vdwg.mxu0
        %v1354 = vunpack.c.l.b16 %v1212
        %v1355 = vunpack.c.l.b16 %v1213
        %v1356 = vpack.c.b16 %v1355, %v1354
        %v1358 = vsel %vm599, %v1356, 0
        %v1361 = vsel %vm1234, %v1223, 0
        %1363 = vmatpush.bf16.msra.mxu0 0
        %1364 = vmatpush.bf16.msra.mxu0 0
        %1365 = vmatpush.bf16.msra.mxu0 0
        %1366 = vmatpush.bf16.msra.mxu0 0
        %1367 = vmatpush.bf16.msra.mxu0 0
        %1368 = vmatpush.bf16.msra.mxu0 0
        %1369 = vmatpush.bf16.msra.mxu0 0
        %1370 = vmatpush.bf16.msra.mxu0 %v1361
        %1371 = vmatmul.bf16.gmra.mxu0 %v1358
        %v1372 = vpop.f32.mrf.mxu0
        %v1373 = vadd.f32 0.0, %v1372
        %v1374 = vpop.f32.mrf.mxu0
        %v1375 = vadd.f32 0.0, %v1374
        %1376 = vdwg.mxu0
        %v1379 = vunpack.c.l.b16 %v1214
        %v1380 = vunpack.c.l.b16 %v1215
        %v1381 = vpack.c.b16 %v1380, %v1379
        %v1383 = vsel %vm599, %v1381, 0
        %v1386 = vsel %vm1234, %v1224, 0
        %1388 = vmatpush.bf16.msra.mxu0 0
        %1389 = vmatpush.bf16.msra.mxu0 0
        %1390 = vmatpush.bf16.msra.mxu0 0
        %1391 = vmatpush.bf16.msra.mxu0 0
        %1392 = vmatpush.bf16.msra.mxu0 0
        %1393 = vmatpush.bf16.msra.mxu0 0
        %1394 = vmatpush.bf16.msra.mxu0 0
        %1395 = vmatpush.bf16.msra.mxu0 %v1386
        %1396 = vmatmul.bf16.gmra.mxu0 %v1383
        %v1397 = vpop.f32.mrf.mxu0
        %v1398 = vadd.f32 0.0, %v1397
        %v1399 = vpop.f32.mrf.mxu0
        %v1400 = vadd.f32 0.0, %v1399
        %1401 = vdwg.mxu0
        %v1404 = vunpack.c.l.b16 %v1216
        %v1405 = vunpack.c.l.b16 %v1217
        %v1406 = vpack.c.b16 %v1405, %v1404
        %v1408 = vsel %vm599, %v1406, 0
        %v1411 = vsel %vm1234, %v1225, 0
        %1413 = vmatpush.bf16.msra.mxu0 0
        %1414 = vmatpush.bf16.msra.mxu0 0
        %1415 = vmatpush.bf16.msra.mxu0 0
        %1416 = vmatpush.bf16.msra.mxu0 0
        %1417 = vmatpush.bf16.msra.mxu0 0
        %1418 = vmatpush.bf16.msra.mxu0 0
        %1419 = vmatpush.bf16.msra.mxu0 0
        %1420 = vmatpush.bf16.msra.mxu0 %v1411
        %1421 = vmatmul.bf16.gmra.mxu0 %v1408
        %v1422 = vpop.f32.mrf.mxu0
        %v1423 = vadd.f32 0.0, %v1422
        %v1424 = vpop.f32.mrf.mxu0
        %v1425 = vadd.f32 0.0, %v1424
        %1426 = vdwg.mxu0
        %v1427 = vsel %vm292, %v1248, 0.0
        %v1428 = vsel %vm292, %v1273, 0.0
        %v1429 = vadd.f32 %v1427, %v1428
        %v1430 = vsel %vm292, %v1298, 0.0
        %v1431 = vadd.f32 %v1429, %v1430
        %v1432 = vsel %vm292, %v1323, 0.0
        %v1433 = vadd.f32 %v1431, %v1432
        %v1434 = vsel %vm292, %v1348, 0.0
        %v1435 = vadd.f32 %v1433, %v1434
        %v1436 = vsel %vm292, %v1373, 0.0
        %v1437 = vadd.f32 %v1435, %v1436
        %v1438 = vsel %vm292, %v1398, 0.0
        %v1439 = vadd.f32 %v1437, %v1438
        %v1440 = vsel %vm292, %v1423, 0.0
        %v1441 = vadd.f32 %v1439, %v1440
        %v1442 = vsel %vm292, %v1250, 0.0
        %v1443 = vsel %vm292, %v1275, 0.0
        %v1444 = vadd.f32 %v1442, %v1443
        %v1445 = vsel %vm292, %v1300, 0.0
        %v1446 = vadd.f32 %v1444, %v1445
        %v1447 = vsel %vm292, %v1325, 0.0
        %v1448 = vadd.f32 %v1446, %v1447
        %v1449 = vsel %vm292, %v1350, 0.0
        %v1450 = vadd.f32 %v1448, %v1449
        %v1451 = vsel %vm292, %v1375, 0.0
        %v1452 = vadd.f32 %v1450, %v1451
        %v1453 = vsel %vm292, %v1400, 0.0
        %v1454 = vadd.f32 %v1452, %v1453
        %v1455 = vsel %vm292, %v1425, 0.0
        %v1456 = vadd.f32 %v1454, %v1455
        %v1457 = vld [vmem:[%s3] sm:$0x1]
        %v1459 = vperm.slane %v1457, 0
        %v1461 = vadd.f32 %v1441, %v1459
        %v1462 = vadd.f32 %v1456, %v1459
        %1463 = vst.msk [vmem:[%s190] sm:$0xff] %vm292, %v1461
        %1464 = vst.msk [vmem:[%s190 + $0x8] sm:$0xff] %vm292, %v1462
        %s1465 = sand.u32 %s115, 1
        %s1466 = scalar_lea.sflag [#allocation3], %s1465
        %s1467 = sand.u32 %s115, 1
        %s1468 = smul.addr %s1467, 16
        %s1469 = scalar_lea.vmem [#allocation2], %s1468
        // Predicated region
        $region37: #{tpu_custom_call.1} parent=35 // pred_check
          %p1470 = pneg %p125
        $region38: #{tpu_custom_call.1} parent=35 // pred_check_branch
          %1472 = sbr.rel (%p1470) target = $region40
        $region39: #{tpu_custom_call.1} parent=35 // pred_region
          %1474 = vsyncadd %s1466, 0
          %s1475 = smul.addr %s18, 2
          %s1476 = smul.addr %s1475, 8
          %s1477 = scalar_lea.hbm %s4, %s1476
          %s1478 = sshll.u32 %s1469, 4
          %s1479 = int_to_ptr.vmem [resolvable:$true] %s1478
          %s1480 = sshll.u32 %s1477, 4
          %s1481 = int_to_ptr.hbm [resolvable:$true] %s1480
          %1486 = dma.vmem_to_hbm [thread:$0]  %s1479, 256, %s1481, %s1466, 128, 128, 8
        $region40: #{tpu_custom_call.1} parent=35 // pred_fallthru
          _
      $region36: #{tpu_custom_call.1} parent=5 // pred_fallthru
        _
      %p1487 = scmp.le.s32.totalorder 2, %s13
      // Predicated region
      $region41: #{tpu_custom_call.1} parent=5 // pred_check
        %p1488 = pneg %p1487
      $region42: #{tpu_custom_call.1} parent=5 // pred_check_branch
        %1490 = sbr.rel (%p1488) target = $region44
      $region43: #{tpu_custom_call.1} parent=5 // pred_region
        %s1491 = ssub.s32 %s13, 2
        // Predicated region
        $region45: #{tpu_custom_call.1} parent=43 // pred_check
          %p1492 = pneg %p131
        $region46: #{tpu_custom_call.1} parent=43 // pred_check_branch
          %1494 = sbr.rel (%p1492) target = $region48
        $region47: #{tpu_custom_call.1} parent=43 // pred_region
          %s1495 = sand.u32 %s116, 1
          %s1496 = scalar_lea.sflag [#allocation3], %s1495
          %s1497 = sand.u32 %s116, 1
          %s1498 = smul.addr %s1497, 16
          %s1499 = scalar_lea.vmem [#allocation2], %s1498
          %1501 = dma.done %s1496, 256
        $region48: #{tpu_custom_call.1} parent=43 // pred_fallthru
          _
      $region44: #{tpu_custom_call.1} parent=5 // pred_fallthru
        _
    $region6: #{tpu_custom_call.1} parent=1 // loop_footer
      %s17 = sadd.s32 1, %s13
    $region7: #{tpu_custom_call.1} parent=1 // loop_footer_branch
      %12 = sbr.rel target = $region3
    $region8: #{tpu_custom_call.1} parent=1 // loop_exit
      _
    %1502 = vsyncpa [#allocation3], 1
    %s1503 = scalar_lea.sflag [#allocation3], 1
    %1504 = vsyncpa %s1503, 1

</llo_original>
